<compile_context>
chip_gen: v7x
topology: tpu7x:2x2x1
jax: 0.10.0
libtpu: 0.0.40
codegen_flags: <defaults>
</compile_context>

<pallas_src>
import dataclasses
from functools import partial

import jax
import jax.numpy as jnp
from jax.experimental import pallas as pl
from jax.experimental.pallas import tpu as pltpu


@dataclasses.dataclass
class AttentionState:
    focus_level: float = 0.0
    emotional_coherence: float = 0.0
    memory_influence: float = 0.0
    narrative_alignment: float = 0.0
    adaptation_rate: float = 0.0


# ----------------------------------------------------------------------------
# In-kernel helpers
# ----------------------------------------------------------------------------
def _project_qkv(xf, wqk_ref, bqk_ref, wv_ref, bv_ref, ap):
    """Q/K/V projections on the batch-flattened (Bt*Sp, Hp) activations.

    wqk is [wq | wk] concatenated on the output axis, so one lane-dense MXU
    matmul produces both Q and K."""
    qk = jnp.dot(xf, wqk_ref[...], preferred_element_type=jnp.float32) + bqk_ref[...]
    v = jnp.dot(xf, wv_ref[...], preferred_element_type=jnp.float32) + bv_ref[...]
    return qk[:, :ap], qk[:, ap:], v


def _fused_attention_output(q, k, v, bt, sp, s_true, ap, hp, md):
    """out = Q @ (K^T @ V), batched per batch element.

    No softmax in the reference module, so the triple product is associative
    and the (S, S) attention matrix is never materialized."""
    q3 = q.reshape(bt, sp, ap).astype(md)
    k3 = k.reshape(bt, sp, ap).astype(md)
    v3 = v.reshape(bt, sp, hp).astype(md)
    if sp != s_true:
        # Padded sequence rows of K / V would contribute their bias to K^T@V;
        # zero them.  (Padded Q rows only produce garbage output rows, which
        # the wrapper slices away.)
        valid = jax.lax.broadcasted_iota(jnp.int32, (bt, sp, 1), 1) < s_true
        k3 = jnp.where(valid, k3, jnp.zeros_like(k3))
        v3 = jnp.where(valid, v3, jnp.zeros_like(v3))
    # kv = K^T @ V : (Bt, Ap, Hp) — contraction over the sequence axis.
    kv = jnp.einsum("bsa,bsh->bah", k3, v3, preferred_element_type=jnp.float32)
    out = jnp.einsum("bsa,bah->bsh", q3, kv.astype(md),
                     preferred_element_type=jnp.float32)
    return out


def _attention_kernel(x_ref, wqk_ref, bqk_ref, wv_ref, bv_ref, out_ref, *,
                      ap, s_true):
    """Default path: out = Q @ (K^T @ V)."""
    bt, sp, hp = x_ref.shape
    md = x_ref.dtype
    xf = x_ref[...].reshape(bt * sp, hp)
    q, k, v = _project_qkv(xf, wqk_ref, bqk_ref, wv_ref, bv_ref, ap)
    out = _fused_attention_output(q, k, v, bt, sp, s_true, ap, hp, md)
    out_ref[...] = out.astype(out_ref.dtype)


def _memory_attention_kernel(x_ref, stable_ref, wqk_ref, bqk_ref, wv_ref, bv_ref,
                             wm1a_ref, wm1b_ref, bm1_ref, wm2r_ref, bm2_ref,
                             out_ref, *, ap, s_true):
    """Memory path: out = (sigmoid(gate_mlp([x; stable])) * Q) @ (K^T @ V)."""
    bt, sp, hp = x_ref.shape
    md = x_ref.dtype
    xf = x_ref[...].reshape(bt * sp, hp)
    sf = stable_ref[...].reshape(bt * sp, hp)
    q, k, v = _project_qkv(xf, wqk_ref, bqk_ref, wv_ref, bv_ref, ap)

    # memory gate: Linear(2H -> H) on concat([x, stable]) without the concat;
    # GELU / sigmoid kept in f32 (v5e has no bf16 VPU/EUP).
    h = (jnp.dot(xf, wm1a_ref[...], preferred_element_type=jnp.float32)
         + jnp.dot(sf, wm1b_ref[...], preferred_element_type=jnp.float32)
         + bm1_ref[...])
    h = jax.nn.gelu(h, approximate=False)          # PyTorch-exact (erf) GELU
    # Linear(H -> 1) as a cross-lane reduction (XLU slot, otherwise idle)
    # instead of a lane-1 MXU matmul; scalar bias comes from SMEM.
    g = jnp.sum(h * wm2r_ref[...], axis=-1, keepdims=True) + bm2_ref[0]
    gate = jax.nn.sigmoid(g)                        # (Bt*Sp, 1), f32

    # gate is per-row, so it commutes past the fused contraction:
    #   (gate * Q) @ (K^T @ V) == ((Q @ K^T) * gate) @ V
    q = q * gate
    out = _fused_attention_output(q, k, v, bt, sp, s_true, ap, hp, md)
    out_ref[...] = out.astype(out_ref.dtype)


# ----------------------------------------------------------------------------
# Wrapper
# ----------------------------------------------------------------------------
def _round_up(n, m):
    return ((n + m - 1) // m) * m


def _pad_to(a, shape):
    pads = [(0, t - s) for s, t in zip(a.shape, shape)]
    if all(p == 0 for _, p in pads):
        return a
    return jnp.pad(a, pads)


def _const_spec(shape):
    # Whole-array block, same block every grid step (weights / biases).
    # TODO(synk): on v7x (64 MiB VMEM) use pipeline_mode=pl.Buffered(1) or a
    #             one-shot manual DMA so constant weight blocks are not
    #             double-buffered at large H.
    return pl.BlockSpec(shape, lambda b: (0,) * len(shape))


@partial(jax.jit, static_argnames=("compute_dtype", "batch_tile"))
def consciousness_attention(x, params, stable_patterns=None, *,
                            compute_dtype=None, batch_tile=None):
    """x: (B, S, H).  Returns attention_output: (B, S, H) in x.dtype.

    compute_dtype=jnp.bfloat16 casts activations / matmul weights to bf16
    (half the HBM->VMEM bytes, 2x MXU rate on all generations); accumulation
    and the gate math stay in f32.
    """
    B, S, H = x.shape
    A = params["wq"].shape[1]
    out_dtype = x.dtype
    cdt = jnp.dtype(out_dtype if compute_dtype is None else compute_dtype)
    f32 = jnp.float32

    # TPU-friendly extents: lane dims padded to 128 (lane-dense, unmasked
    # stores), sequence padded to the sublane packing of the compute dtype.
    sub = max(8, 8 * (4 // cdt.itemsize))           # 8 for f32, 16 for bf16
    Hp = _round_up(H, 128)
    Ap = _round_up(A, 128)
    Sp = _round_up(S, sub)

    # Fold batch elements into one block so each grid step feeds the MXU with
    # Bt*Sp rows and the ~0.35us/step pipeline overhead is amortized.
    if batch_tile is None:
        bt = max(1, min(B, 1024 // Sp))
        while B % bt:
            bt -= 1
    else:
        bt = batch_tile
    assert B % bt == 0, "batch_tile must divide the batch size"
    grid = (B // bt,)

    # Zero padding keeps the math exact: padded weight rows/cols and padded
    # bias lanes are zero; padded sequence rows of K/V are masked in-kernel.
    xp = _pad_to(x, (B, Sp, Hp)).astype(cdt)
    wqk = jnp.concatenate([_pad_to(params["wq"], (Hp, Ap)),
                           _pad_to(params["wk"], (Hp, Ap))], axis=1).astype(cdt)
    bqk = jnp.concatenate([_pad_to(params["bq"], (1, Ap)),
                           _pad_to(params["bk"], (1, Ap))], axis=1).astype(f32)
    wv = _pad_to(params["wv"], (Hp, Hp)).astype(cdt)
    bv = _pad_to(params["bv"], (1, Hp)).astype(f32)

    act_spec = pl.BlockSpec((bt, Sp, Hp), lambda b: (b, 0, 0))

    if stable_patterns is None:
        kernel = partial(_attention_kernel, ap=Ap, s_true=S)
        operands = (xp, wqk, bqk, wv, bv)
        in_specs = [act_spec,
                    _const_spec((Hp, 2 * Ap)), _const_spec((1, 2 * Ap)),
                    _const_spec((Hp, Hp)), _const_spec((1, Hp))]
    else:
        stp = _pad_to(stable_patterns, (B, Sp, Hp)).astype(cdt)
        wm1a = _pad_to(params["wm1a"], (Hp, Hp)).astype(cdt)
        wm1b = _pad_to(params["wm1b"], (Hp, Hp)).astype(cdt)
        bm1 = _pad_to(params["bm1"], (1, Hp)).astype(f32)
        wm2r = _pad_to(params["wm2"].T, (1, Hp)).astype(f32)   # (1, Hp) row
        bm2 = params["bm2"].reshape((1,)).astype(f32)          # scalar -> SMEM
        kernel = partial(_memory_attention_kernel, ap=Ap, s_true=S)
        operands = (xp, stp, wqk, bqk, wv, bv, wm1a, wm1b, bm1, wm2r, bm2)
        in_specs = [act_spec, act_spec,
                    _const_spec((Hp, 2 * Ap)), _const_spec((1, 2 * Ap)),
                    _const_spec((Hp, Hp)), _const_spec((1, Hp)),
                    _const_spec((Hp, Hp)), _const_spec((Hp, Hp)),
                    _const_spec((1, Hp)), _const_spec((1, Hp)),
                    pl.BlockSpec(memory_space=pltpu.MemorySpace.SMEM)]

    out = pl.pallas_call(
        kernel,
        out_shape=jax.ShapeDtypeStruct((B, Sp, Hp), out_dtype),
        grid=grid,
        in_specs=in_specs,
        out_specs=pl.BlockSpec((bt, Sp, Hp), lambda b: (b, 0, 0)),
        compiler_params=pltpu.CompilerParams(
            dimension_semantics=("parallel",)),
    )(*operands)
    return out[:, :S, :H]


# ----------------------------------------------------------------------------
# Parameters / reference
# ----------------------------------------------------------------------------
def init_params(key, hidden_size, attention_dims, llama_hidden_size):
    """Deterministic synthetic parameters (shapes from the module __init__)."""
    ks = jax.random.split(key, 12)
    sc = 0.05
    p = {
        "wq":   sc * jax.random.normal(ks[0], (hidden_size, attention_dims), jnp.float32),
        "bq":   sc * jax.random.normal(ks[1], (1, attention_dims), jnp.float32),
        "wk":   sc * jax.random.normal(ks[2], (hidden_size, attention_dims), jnp.float32),
        "bk":   sc * jax.random.normal(ks[3], (1, attention_dims), jnp.float32),
        "wv":   sc * jax.random.normal(ks[4], (hidden_size, hidden_size), jnp.float32),
        "bv":   sc * jax.random.normal(ks[5], (1, hidden_size), jnp.float32),
        # memory_gate: Linear(2H -> H) split into the x-half and stable-half
        "wm1a": sc * jax.random.normal(ks[6], (hidden_size, hidden_size), jnp.float32),
        "wm1b": sc * jax.random.normal(ks[7], (hidden_size, hidden_size), jnp.float32),
        "bm1":  sc * jax.random.normal(ks[8], (1, hidden_size), jnp.float32),
        "wm2":  sc * jax.random.normal(ks[9], (hidden_size, 1), jnp.float32),
        "bm2":  sc * jax.random.normal(ks[10], (1, 1), jnp.float32),
        # narrative_projection exists in __init__ but its use (_integrate_narrative)
        # is undefined in the reference source; allocated for shape fidelity only.
        "wn":   sc * jax.random.normal(ks[11], (llama_hidden_size, hidden_size), jnp.float32),
        "bn":   jnp.zeros((1, hidden_size), jnp.float32),
    }
    return p


def _reference(x, params, stable=None):
    q = x @ params["wq"] + params["bq"]
    k = x @ params["wk"] + params["bk"]
    v = x @ params["wv"] + params["bv"]
    attn = jnp.einsum("bsa,bta->bst", q, k)
    if stable is not None:
        h = x @ params["wm1a"] + stable @ params["wm1b"] + params["bm1"]
        h = jax.nn.gelu(h, approximate=False)
        gate = jax.nn.sigmoid(h @ params["wm2"] + params["bm2"])
        attn = attn * gate
    return jnp.einsum("bst,bth->bsh", attn, v)


if __name__ == "__main__":
    B, S, H, A, LH = 2, 8, 32, 16, 64  # batch, seq, hidden, attention_dims, llama_hidden

    key = jax.random.PRNGKey(0)
    kx, ks, kp = jax.random.split(key, 3)
    x = jax.random.normal(kx, (B, S, H), jnp.float32)
    stable_patterns = jax.random.normal(ks, (B, S, H), jnp.float32)
    params = init_params(kp, H, A, LH)

    # Default path (no optional contexts), f32.
    out = jax.block_until_ready(consciousness_attention(x, params))
    ref = _reference(x, params)
    assert jnp.allclose(out, ref, atol=1e-4, rtol=1e-3), "default path mismatch"

    # Memory-context path (memory_gate MLP inside the kernel), f32.
    out_mem = jax.block_until_ready(consciousness_attention(x, params, stable_patterns))
    ref_mem = _reference(x, params, stable_patterns)
    assert jnp.allclose(out_mem, ref_mem, atol=1e-4, rtol=1e-3), "memory path mismatch"

    # bf16 compute (f32 accumulation) — looser tolerance.
    out_bf = jax.block_until_ready(
        consciousness_attention(x, params, compute_dtype=jnp.bfloat16))
    assert jnp.allclose(out_bf, ref, atol=7.5e-2, rtol=1e-1), "bf16 default mismatch"
    out_mem_bf = jax.block_until_ready(
        consciousness_attention(x, params, stable_patterns, compute_dtype=jnp.bfloat16))
    assert jnp.allclose(out_mem_bf, ref_mem, atol=7.5e-2, rtol=1e-1), "bf16 memory mismatch"

    state = AttentionState()  # _update_state undefined in source -> defaults returned
    _ = state

    print("KERNEL_OK")
</pallas_src>

<mosaic_0001>
module attributes {stable_mosaic.version = 11 : i64} {
  func.func @_attention_kernel(%arg0: i32, %arg1: memref<2x8x128xf32, #tpu.memory_space<vmem>>, %arg2: memref<128x256xf32, #tpu.memory_space<vmem>>, %arg3: memref<1x256xf32, #tpu.memory_space<vmem>>, %arg4: memref<128x128xf32, #tpu.memory_space<vmem>>, %arg5: memref<1x128xf32, #tpu.memory_space<vmem>>, %arg6: memref<2x8x128xf32, #tpu.memory_space<vmem>>) attributes {dimension_semantics = [#tpu.dimension_semantics<parallel>], iteration_bounds = array<i64: 1>, scalar_prefetch = 0 : i64, scratch_operands = 0 : i64, tpu.core_type = #tpu.core_type<tc>, window_params = [{transform_indices = @transform_0, window_bounds = array<i64: 2, 8, 128>}, {pipeline_mode = #tpu.pipeline_mode<synchronous>, transform_indices = @transform_1, window_bounds = array<i64: 128, 256>}, {pipeline_mode = #tpu.pipeline_mode<synchronous>, transform_indices = @transform_2, window_bounds = array<i64: 1, 256>}, {pipeline_mode = #tpu.pipeline_mode<synchronous>, transform_indices = @transform_3, window_bounds = array<i64: 128, 128>}, {pipeline_mode = #tpu.pipeline_mode<synchronous>, transform_indices = @transform_4, window_bounds = array<i64: 1, 128>}, {transform_indices = @transform_5, window_bounds = array<i64: 2, 8, 128>}]} {
    %c0 = arith.constant 0 : index
    %c0_0 = arith.constant 0 : index
    %c0_1 = arith.constant 0 : index
    %0 = vector.load %arg1[%c0, %c0_0, %c0_1] : memref<2x8x128xf32, #tpu.memory_space<vmem>>, vector<2x8x128xf32>
    %1 = vector.shape_cast %0 : vector<2x8x128xf32> to vector<16x128xf32>
    %c0_2 = arith.constant 0 : index
    %c0_3 = arith.constant 0 : index
    %2 = vector.load %arg2[%c0_2, %c0_3] : memref<128x256xf32, #tpu.memory_space<vmem>>, vector<128x256xf32>
    %cst = arith.constant dense<0.000000e+00> : vector<16x256xf32>
    %3 = tpu.matmul %1, %2, %cst {dimension_numbers = #tpu.dot_dimension_numbers<[1], [0], [0], [1], [0, 0, 1, 1], [], []>} : vector<16x128xf32>, vector<128x256xf32>, vector<16x256xf32> -> vector<16x256xf32>
    %c0_4 = arith.constant 0 : index
    %c0_5 = arith.constant 0 : index
    %4 = vector.load %arg3[%c0_4, %c0_5] : memref<1x256xf32, #tpu.memory_space<vmem>>, vector<1x256xf32>
    %5 = vector.broadcast %4 : vector<1x256xf32> to vector<16x256xf32>
    %6 = arith.addf %3, %5 : vector<16x256xf32>
    %c0_6 = arith.constant 0 : index
    %c0_7 = arith.constant 0 : index
    %7 = vector.load %arg4[%c0_6, %c0_7] : memref<128x128xf32, #tpu.memory_space<vmem>>, vector<128x128xf32>
    %cst_8 = arith.constant dense<0.000000e+00> : vector<16x128xf32>
    %8 = tpu.matmul %1, %7, %cst_8 {dimension_numbers = #tpu.dot_dimension_numbers<[1], [0], [0], [1], [0, 0, 1, 1], [], []>} : vector<16x128xf32>, vector<128x128xf32>, vector<16x128xf32> -> vector<16x128xf32>
    %c0_9 = arith.constant 0 : index
    %c0_10 = arith.constant 0 : index
    %9 = vector.load %arg5[%c0_9, %c0_10] : memref<1x128xf32, #tpu.memory_space<vmem>>, vector<1x128xf32>
    %10 = vector.broadcast %9 : vector<1x128xf32> to vector<16x128xf32>
    %11 = arith.addf %8, %10 : vector<16x128xf32>
    %12 = vector.extract_strided_slice %6 {offsets = [0, 0], sizes = [16, 128], strides = [1, 1]} : vector<16x256xf32> to vector<16x128xf32>
    %13 = vector.extract_strided_slice %6 {offsets = [0, 128], sizes = [16, 128], strides = [1, 1]} : vector<16x256xf32> to vector<16x128xf32>
    %14 = vector.shape_cast %12 : vector<16x128xf32> to vector<2x8x128xf32>
    %15 = vector.shape_cast %13 : vector<16x128xf32> to vector<2x8x128xf32>
    %16 = vector.shape_cast %11 : vector<16x128xf32> to vector<2x8x128xf32>
    "tpu.trace_start"() <{level = 10 : i32, message = "bsa,bsh->bah"}> : () -> ()
    %cst_11 = arith.constant dense<0.000000e+00> : vector<2x128x128xf32>
    %17 = tpu.matmul %15, %16, %cst_11 {dimension_numbers = #tpu.dot_dimension_numbers<[1], [1], [2], [2], [0, 0, 0, 2, 1, 2], [0], [0]>} : vector<2x8x128xf32>, vector<2x8x128xf32>, vector<2x128x128xf32> -> vector<2x128x128xf32>
    "tpu.trace_stop"() : () -> ()
    "tpu.trace_start"() <{level = 10 : i32, message = "bsa,bah->bsh"}> : () -> ()
    %cst_12 = arith.constant dense<0.000000e+00> : vector<2x8x128xf32>
    %18 = tpu.matmul %14, %17, %cst_12 {dimension_numbers = #tpu.dot_dimension_numbers<[2], [1], [1], [2], [0, 0, 0, 1, 1, 2], [0], [0]>} : vector<2x8x128xf32>, vector<2x128x128xf32>, vector<2x8x128xf32> -> vector<2x8x128xf32>
    "tpu.trace_stop"() : () -> ()
    %c0_13 = arith.constant 0 : index
    %c0_14 = arith.constant 0 : index
    %c0_15 = arith.constant 0 : index
    %19 = vector.load %arg6[%c0_13, %c0_14, %c0_15] : memref<2x8x128xf32, #tpu.memory_space<vmem>>, vector<2x8x128xf32>
    tpu.vector_store %arg6[%c0_13, %c0_14, %c0_15], %18 {strides = array<i32>} : memref<2x8x128xf32, #tpu.memory_space<vmem>>, vector<2x8x128xf32>,
    return
  }
  func.func @transform_0(%arg0: i32) -> (i32, i32, i32) {
    %c0_i32 = arith.constant 0 : i32
    %c0_i32_0 = arith.constant 0 : i32
    %c0_i32_1 = arith.constant 0 : i32
    return %arg0, %c0_i32, %c0_i32_0 : i32, i32, i32
  }
  func.func @transform_1(%arg0: i32) -> (i32, i32) {
    %c0_i32 = arith.constant 0 : i32
    %c0_i32_0 = arith.constant 0 : i32
    %c0_i32_1 = arith.constant 0 : i32
    return %c0_i32, %c0_i32_0 : i32, i32
  }
  func.func @transform_2(%arg0: i32) -> (i32, i32) {
    %c0_i32 = arith.constant 0 : i32
    %c0_i32_0 = arith.constant 0 : i32
    %c0_i32_1 = arith.constant 0 : i32
    return %c0_i32, %c0_i32_0 : i32, i32
  }
  func.func @transform_3(%arg0: i32) -> (i32, i32) {
    %c0_i32 = arith.constant 0 : i32
    %c0_i32_0 = arith.constant 0 : i32
    %c0_i32_1 = arith.constant 0 : i32
    return %c0_i32, %c0_i32_0 : i32, i32
  }
  func.func @transform_4(%arg0: i32) -> (i32, i32) {
    %c0_i32 = arith.constant 0 : i32
    %c0_i32_0 = arith.constant 0 : i32
    %c0_i32_1 = arith.constant 0 : i32
    return %c0_i32, %c0_i32_0 : i32, i32
  }
  func.func @transform_5(%arg0: i32) -> (i32, i32, i32) {
    %c0_i32 = arith.constant 0 : i32
    %c0_i32_0 = arith.constant 0 : i32
    %c0_i32_1 = arith.constant 0 : i32
    return %arg0, %c0_i32, %c0_i32_0 : i32, i32, i32
  }
}

</mosaic_0001>

<llo_original>
// kernel: consciousness_attention.1
$region0: #{consciousness_attention.1}
  #allocation0 [shape = 'u32[]', space=smem, size = 0x4, offset = 0x4, fixed_abs, tag = 'smem constant byte address 0x4 - core index']
  #allocation1 [shape = 'u32[144,128]{1,0:T(1,128)}', space=vmem, size = 0x12000, scoped, tag = 'internal scratch']
  %s0 = inlined_call_operand.vmem [shape: f32[2,8,128], index: 0, kind: input, shape index: {}]
  %s1 = inlined_call_operand.vmem [shape: f32[128,256], index: 1, kind: input, shape index: {}]
  %s2 = inlined_call_operand.vmem [shape: f32[1,256], index: 2, kind: input, shape index: {}]
  %s3 = inlined_call_operand.vmem [shape: f32[128,128], index: 3, kind: input, shape index: {}]
  %s4 = inlined_call_operand.vmem [shape: f32[1,128], index: 4, kind: input, shape index: {}]
  %s5 = inlined_call_operand.hbm [shape: f32[2,8,128], index: 5, kind: output, shape index: {}]
  %s6 = sld [smem:[#allocation0]]
  $region30: #{consciousness_attention.1} parent=0
    _
  %s8 = ssub.s32 1, %s6
  %s9 = scalar_select 0, %s8, %s6
  $region1: #{consciousness_attention.1} parent=0
    #allocation2 [shape = 'u8[8192]{0}', space=vmem, size = 0x2000, scoped, tag = 'output window, operand 0, single buffered']
    #allocation3 [shape = 's32[1]{0}', space=sflag, size = 0x4, scoped, tag = 'scoped memory for consciousness_attention.1']
    %10 = vsyncpa [#allocation3], 0
    // Predicated region
    $region2: #{consciousness_attention.1} parent=1 // pred_check
      _
    $region3: #{consciousness_attention.1} parent=1 // pred_check_branch
      %12 = sbr.rel (0) target = $region5
    $region4: #{consciousness_attention.1} parent=1 // pred_region
      _
    $region5: #{consciousness_attention.1} parent=1 // pred_fallthru
      _
    // Predicated region
    $region6: #{consciousness_attention.1} parent=1 // pred_check
      _
    $region7: #{consciousness_attention.1} parent=1 // pred_check_branch
      %14 = sbr.rel (0) target = $region9
    $region8: #{consciousness_attention.1} parent=1 // pred_region
      _
    $region9: #{consciousness_attention.1} parent=1 // pred_fallthru
      _
    // Predicated region
    $region10: #{consciousness_attention.1} parent=1 // pred_check
      _
    $region11: #{consciousness_attention.1} parent=1 // pred_check_branch
      %16 = sbr.rel (0) target = $region13
    $region12: #{consciousness_attention.1} parent=1 // pred_region
      _
    $region13: #{consciousness_attention.1} parent=1 // pred_fallthru
      _
    // Predicated region
    $region14: #{consciousness_attention.1} parent=1 // pred_check
      _
    $region15: #{consciousness_attention.1} parent=1 // pred_check_branch
      %18 = sbr.rel (0) target = $region17
    $region16: #{consciousness_attention.1} parent=1 // pred_region
      _
    $region17: #{consciousness_attention.1} parent=1 // pred_fallthru
      _
    // Predicated region
    $region18: #{consciousness_attention.1} parent=1 // pred_check
      _
    $region19: #{consciousness_attention.1} parent=1 // pred_check_branch
      %20 = sbr.rel (0) target = $region21
    $region20: #{consciousness_attention.1} parent=1 // pred_region
      _
    $region21: #{consciousness_attention.1} parent=1 // pred_fallthru
      _
    %v21 = vld [vmem:[%s0] sm:$0xff]
    %v22 = vld [vmem:[%s0 + $0x8] sm:$0xff]
    %v23 = vld [vmem:[%s1] sm:$0xff]
    %v24 = vld [vmem:[%s1 + $0x8] sm:$0xff]
    %v25 = vld [vmem:[%s1 + $0x10] sm:$0xff]
    %v26 = vld [vmem:[%s1 + $0x18] sm:$0xff]
    %v27 = vld [vmem:[%s1 + $0x20] sm:$0xff]
    %v28 = vld [vmem:[%s1 + $0x28] sm:$0xff]
    %v29 = vld [vmem:[%s1 + $0x30] sm:$0xff]
    %v30 = vld [vmem:[%s1 + $0x38] sm:$0xff]
    %v31 = vld [vmem:[%s1 + $0x40] sm:$0xff]
    %v32 = vld [vmem:[%s1 + $0x48] sm:$0xff]
    %v33 = vld [vmem:[%s1 + $0x50] sm:$0xff]
    %v34 = vld [vmem:[%s1 + $0x58] sm:$0xff]
    %v35 = vld [vmem:[%s1 + $0x60] sm:$0xff]
    %v36 = vld [vmem:[%s1 + $0x68] sm:$0xff]
    %v37 = vld [vmem:[%s1 + $0x70] sm:$0xff]
    %v38 = vld [vmem:[%s1 + $0x78] sm:$0xff]
    %v39 = vld [vmem:[%s1 + $0x80] sm:$0xff]
    %v40 = vld [vmem:[%s1 + $0x88] sm:$0xff]
    %v41 = vld [vmem:[%s1 + $0x90] sm:$0xff]
    %v42 = vld [vmem:[%s1 + $0x98] sm:$0xff]
    %v43 = vld [vmem:[%s1 + $0xa0] sm:$0xff]
    %v44 = vld [vmem:[%s1 + $0xa8] sm:$0xff]
    %v45 = vld [vmem:[%s1 + $0xb0] sm:$0xff]
    %v46 = vld [vmem:[%s1 + $0xb8] sm:$0xff]
    %v47 = vld [vmem:[%s1 + $0xc0] sm:$0xff]
    %v48 = vld [vmem:[%s1 + $0xc8] sm:$0xff]
    %v49 = vld [vmem:[%s1 + $0xd0] sm:$0xff]
    %v50 = vld [vmem:[%s1 + $0xd8] sm:$0xff]
    %v51 = vld [vmem:[%s1 + $0xe0] sm:$0xff]
    %v52 = vld [vmem:[%s1 + $0xe8] sm:$0xff]
    %v53 = vld [vmem:[%s1 + $0xf0] sm:$0xff]
    %v54 = vld [vmem:[%s1 + $0xf8] sm:$0xff]
    %v55 = vld [vmem:[%s2] sm:$0x3]
    %v57 = vlaneseq
    %v58 = vshrl.u32 %v57, 7
    %v59 = vsub.s32 0, %v58
    %v60 = vrot.slane %v55, %v59
    %v61 = vlaneseq
    %v62 = vshrl.u32 %v61, 7
    %v63 = vsub.s32 1, %v62
    %v64 = vrot.slane %v55, %v63
    %67 = vmatprep.subr.mxu0 %v24
    %68 = vmatpush1.msra.mxu0 %v23
    %69 = vmatprep.subr.mxu0 %v26
    %70 = vmatpush1.msra.mxu0 %v25
    %71 = vmatprep.subr.mxu0 %v28
    %72 = vmatpush1.msra.mxu0 %v27
    %73 = vmatprep.subr.mxu0 %v30
    %74 = vmatpush1.msra.mxu0 %v29
    %75 = vmatprep.subr.mxu0 %v32
    %76 = vmatpush1.msra.mxu0 %v31
    %77 = vmatprep.subr.mxu0 %v34
    %78 = vmatpush1.msra.mxu0 %v33
    %79 = vmatprep.subr.mxu0 %v36
    %80 = vmatpush1.msra.mxu0 %v35
    %81 = vmatprep.subr.mxu0 %v38
    %82 = vmatpush1.msra.mxu0 %v37
    %83 = vmatprep.subr.mxu0 %v40
    %84 = vmatpush1.msra.mxu0 %v39
    %85 = vmatprep.subr.mxu0 %v42
    %86 = vmatpush1.msra.mxu0 %v41
    %87 = vmatprep.subr.mxu0 %v44
    %88 = vmatpush1.msra.mxu0 %v43
    %89 = vmatprep.subr.mxu0 %v46
    %90 = vmatpush1.msra.mxu0 %v45
    %91 = vmatprep.subr.mxu0 %v48
    %92 = vmatpush1.msra.mxu0 %v47
    %93 = vmatprep.subr.mxu0 %v50
    %94 = vmatpush1.msra.mxu0 %v49
    %95 = vmatprep.subr.mxu0 %v52
    %96 = vmatpush1.msra.mxu0 %v51
    %97 = vmatprep.subr.mxu0 %v54
    %98 = vmatpush1.msra.mxu0 %v53
    %99 = vmatprep.subr.mxu0 0.0
    %100 = vmatpush1.msra.mxu0 0.0
    %101 = vmatprep.subr.mxu0 0.0
    %102 = vmatpush1.msra.mxu0 0.0
    %103 = vmatprep.subr.mxu0 0.0
    %104 = vmatpush1.msra.mxu0 0.0
    %105 = vmatprep.subr.mxu0 0.0
    %106 = vmatpush1.msra.mxu0 0.0
    %107 = vmatprep.subr.mxu0 0.0
    %108 = vmatpush1.msra.mxu0 0.0
    %109 = vmatprep.subr.mxu0 0.0
    %110 = vmatpush1.msra.mxu0 0.0
    %111 = vmatprep.subr.mxu0 0.0
    %112 = vmatpush1.msra.mxu0 0.0
    %113 = vmatprep.subr.mxu0 0.0
    %114 = vmatpush1.msra.mxu0 0.0
    %115 = vmatprep.subr.mxu0 0.0
    %116 = vmatpush1.msra.mxu0 0.0
    %117 = vmatprep.subr.mxu0 0.0
    %118 = vmatpush1.msra.mxu0 0.0
    %119 = vmatprep.subr.mxu0 0.0
    %120 = vmatpush1.msra.mxu0 0.0
    %121 = vmatprep.subr.mxu0 0.0
    %122 = vmatpush1.msra.mxu0 0.0
    %123 = vmatprep.subr.mxu0 0.0
    %124 = vmatpush1.msra.mxu0 0.0
    %125 = vmatprep.subr.mxu0 0.0
    %126 = vmatpush1.msra.mxu0 0.0
    %127 = vmatprep.subr.mxu0 0.0
    %128 = vmatpush1.msra.mxu0 0.0
    %129 = vmatprep.subr.mxu0 0.0
    %130 = vmatpush1.msra.mxu0 0.0
    %131 = vmatprep.mubr.f32.mxu0 0.0
    %132 = vmatmul.mubr.f32.gmra.mrb[0].mxu0 %v21
    %v133 = vpop.f32.mrb[0].mxu0
    %v134 = vadd.f32 %v60, %v133
    %v135 = vpop.f32.mrb[0].mxu0
    %v136 = vadd.f32 %v64, %v135
    %137 = vmatprep.mubr.f32.mxu0 0.0
    %138 = vmatmul.mubr.f32.gmra.mrb[0].mxu0 %v22
    %v139 = vpop.f32.mrb[0].mxu0
    %v140 = vadd.f32 %v60, %v139
    %v141 = vpop.f32.mrb[0].mxu0
    %v142 = vadd.f32 %v64, %v141
    %143 = vdwg.mxu0
    %v144 = vld [vmem:[%s3] sm:$0xff]
    %v145 = vld [vmem:[%s3 + $0x8] sm:$0xff]
    %v146 = vld [vmem:[%s3 + $0x10] sm:$0xff]
    %v147 = vld [vmem:[%s3 + $0x18] sm:$0xff]
    %v148 = vld [vmem:[%s3 + $0x20] sm:$0xff]
    %v149 = vld [vmem:[%s3 + $0x28] sm:$0xff]
    %v150 = vld [vmem:[%s3 + $0x30] sm:$0xff]
    %v151 = vld [vmem:[%s3 + $0x38] sm:$0xff]
    %v152 = vld [vmem:[%s3 + $0x40] sm:$0xff]
    %v153 = vld [vmem:[%s3 + $0x48] sm:$0xff]
    %v154 = vld [vmem:[%s3 + $0x50] sm:$0xff]
    %v155 = vld [vmem:[%s3 + $0x58] sm:$0xff]
    %v156 = vld [vmem:[%s3 + $0x60] sm:$0xff]
    %v157 = vld [vmem:[%s3 + $0x68] sm:$0xff]
    %v158 = vld [vmem:[%s3 + $0x70] sm:$0xff]
    %v159 = vld [vmem:[%s3 + $0x78] sm:$0xff]
    %v160 = vld [vmem:[%s4] sm:$0x1]
    %v162 = vlaneseq
    %v163 = vshrl.u32 %v162, 7
    %v164 = vsub.s32 0, %v163
    %v165 = vrot.slane %v160, %v164
    %167 = vmatprep.subr.mxu0 0.0
    %168 = vmatpush1.msra.mxu0 %v144
    %169 = vmatprep.subr.mxu0 0.0
    %170 = vmatpush1.msra.mxu0 %v145
    %171 = vmatprep.subr.mxu0 0.0
    %172 = vmatpush1.msra.mxu0 %v146
    %173 = vmatprep.subr.mxu0 0.0
    %174 = vmatpush1.msra.mxu0 %v147
    %175 = vmatprep.subr.mxu0 0.0
    %176 = vmatpush1.msra.mxu0 %v148
    %177 = vmatprep.subr.mxu0 0.0
    %178 = vmatpush1.msra.mxu0 %v149
    %179 = vmatprep.subr.mxu0 0.0
    %180 = vmatpush1.msra.mxu0 %v150
    %181 = vmatprep.subr.mxu0 0.0
    %182 = vmatpush1.msra.mxu0 %v151
    %183 = vmatprep.subr.mxu0 0.0
    %184 = vmatpush1.msra.mxu0 %v152
    %185 = vmatprep.subr.mxu0 0.0
    %186 = vmatpush1.msra.mxu0 %v153
    %187 = vmatprep.subr.mxu0 0.0
    %188 = vmatpush1.msra.mxu0 %v154
    %189 = vmatprep.subr.mxu0 0.0
    %190 = vmatpush1.msra.mxu0 %v155
    %191 = vmatprep.subr.mxu0 0.0
    %192 = vmatpush1.msra.mxu0 %v156
    %193 = vmatprep.subr.mxu0 0.0
    %194 = vmatpush1.msra.mxu0 %v157
    %195 = vmatprep.subr.mxu0 0.0
    %196 = vmatpush1.msra.mxu0 %v158
    %197 = vmatprep.subr.mxu0 0.0
    %198 = vmatpush1.msra.mxu0 %v159
    %199 = vmatprep.subr.mxu0 0.0
    %200 = vmatpush1.msra.mxu0 0.0
    %201 = vmatprep.subr.mxu0 0.0
    %202 = vmatpush1.msra.mxu0 0.0
    %203 = vmatprep.subr.mxu0 0.0
    %204 = vmatpush1.msra.mxu0 0.0
    %205 = vmatprep.subr.mxu0 0.0
    %206 = vmatpush1.msra.mxu0 0.0
    %207 = vmatprep.subr.mxu0 0.0
    %208 = vmatpush1.msra.mxu0 0.0
    %209 = vmatprep.subr.mxu0 0.0
    %210 = vmatpush1.msra.mxu0 0.0
    %211 = vmatprep.subr.mxu0 0.0
    %212 = vmatpush1.msra.mxu0 0.0
    %213 = vmatprep.subr.mxu0 0.0
    %214 = vmatpush1.msra.mxu0 0.0
    %215 = vmatprep.subr.mxu0 0.0
    %216 = vmatpush1.msra.mxu0 0.0
    %217 = vmatprep.subr.mxu0 0.0
    %218 = vmatpush1.msra.mxu0 0.0
    %219 = vmatprep.subr.mxu0 0.0
    %220 = vmatpush1.msra.mxu0 0.0
    %221 = vmatprep.subr.mxu0 0.0
    %222 = vmatpush1.msra.mxu0 0.0
    %223 = vmatprep.subr.mxu0 0.0
    %224 = vmatpush1.msra.mxu0 0.0
    %225 = vmatprep.subr.mxu0 0.0
    %226 = vmatpush1.msra.mxu0 0.0
    %227 = vmatprep.subr.mxu0 0.0
    %228 = vmatpush1.msra.mxu0 0.0
    %229 = vmatprep.subr.mxu0 0.0
    %230 = vmatpush1.msra.mxu0 0.0
    %231 = vmatprep.mubr.f32.mxu0 0.0
    %232 = vmatmul.mubr.f32.gmra.mrb[0].mxu0 %v21
    %v233 = vpop.f32.mrb[0].mxu0
    %v234 = vadd.f32 %v165, %v233
    %v235 = vpop.f32.mrb[0].mxu0
    %236 = vmatprep.mubr.f32.mxu0 0.0
    %237 = vmatmul.mubr.f32.gmra.mrb[0].mxu0 %v22
    %v238 = vpop.f32.mrb[0].mxu0
    %v239 = vadd.f32 %v165, %v238
    %v240 = vpop.f32.mrb[0].mxu0
    %241 = vdwg.mxu0
    %242 = vxpose.xlu0.b32.start [1/16] %v136, 128
    %243 = vxpose.xlu0.b32.cont [2/16] 0.0, 128
    %244 = vxpose.xlu0.b32.cont [3/16] 0.0, 128
    %245 = vxpose.xlu0.b32.cont [4/16] 0.0, 128
    %246 = vxpose.xlu0.b32.cont [5/16] 0.0, 128
    %247 = vxpose.xlu0.b32.cont [6/16] 0.0, 128
    %248 = vxpose.xlu0.b32.cont [7/16] 0.0, 128
    %249 = vxpose.xlu0.b32.cont [8/16] 0.0, 128
    %250 = vxpose.xlu0.b32.cont [9/16] 0.0, 128
    %251 = vxpose.xlu0.b32.cont [10/16] 0.0, 128
    %252 = vxpose.xlu0.b32.cont [11/16] 0.0, 128
    %253 = vxpose.xlu0.b32.cont [12/16] 0.0, 128
    %254 = vxpose.xlu0.b32.cont [13/16] 0.0, 128
    %255 = vxpose.xlu0.b32.cont [14/16] 0.0, 128
    %256 = vxpose.xlu0.b32.cont [15/16] 0.0, 128
    %257 = vxpose.xlu0.b32.end [16/16] 0.0, 128
    %v258 = vpop.trf.xlu0
    %v259 = vpop.trf.xlu0
    %v260 = vpop.trf.xlu0
    %v261 = vpop.trf.xlu0
    %v262 = vpop.trf.xlu0
    %v263 = vpop.trf.xlu0
    %v264 = vpop.trf.xlu0
    %v265 = vpop.trf.xlu0
    %v266 = vpop.trf.xlu0
    %v267 = vpop.trf.xlu0
    %v268 = vpop.trf.xlu0
    %v269 = vpop.trf.xlu0
    %v270 = vpop.trf.xlu0
    %v271 = vpop.trf.xlu0
    %v272 = vpop.trf.xlu0
    %v273 = vpop.trf.xlu0
    %vm274 = vcmask 64512
    %v276 = vsel %vm274, %v258, 0
    %v279 = vsel %vm274, %v259, 0
    %v282 = vsel %vm274, %v260, 0
    %v285 = vsel %vm274, %v261, 0
    %v288 = vsel %vm274, %v262, 0
    %v291 = vsel %vm274, %v263, 0
    %v294 = vsel %vm274, %v264, 0
    %v297 = vsel %vm274, %v265, 0
    %v300 = vsel %vm274, %v266, 0
    %v303 = vsel %vm274, %v267, 0
    %v306 = vsel %vm274, %v268, 0
    %v309 = vsel %vm274, %v269, 0
    %v312 = vsel %vm274, %v270, 0
    %v315 = vsel %vm274, %v271, 0
    %v318 = vsel %vm274, %v272, 0
    %v321 = vsel %vm274, %v273, 0
    %323 = vmatprep.subr.mxu0 0.0
    %324 = vmatpush1.msra.mxu0 %v234
    %325 = vmatprep.subr.mxu0 0.0
    %326 = vmatpush1.msra.mxu0 0.0
    %327 = vmatprep.subr.mxu0 0.0
    %328 = vmatpush1.msra.mxu0 0.0
    %329 = vmatprep.subr.mxu0 0.0
    %330 = vmatpush1.msra.mxu0 0.0
    %331 = vmatprep.subr.mxu0 0.0
    %332 = vmatpush1.msra.mxu0 0.0
    %333 = vmatprep.subr.mxu0 0.0
    %334 = vmatpush1.msra.mxu0 0.0
    %335 = vmatprep.subr.mxu0 0.0
    %336 = vmatpush1.msra.mxu0 0.0
    %337 = vmatprep.subr.mxu0 0.0
    %338 = vmatpush1.msra.mxu0 0.0
    %339 = vmatprep.subr.mxu0 0.0
    %340 = vmatpush1.msra.mxu0 0.0
    %341 = vmatprep.subr.mxu0 0.0
    %342 = vmatpush1.msra.mxu0 0.0
    %343 = vmatprep.subr.mxu0 0.0
    %344 = vmatpush1.msra.mxu0 0.0
    %345 = vmatprep.subr.mxu0 0.0
    %346 = vmatpush1.msra.mxu0 0.0
    %347 = vmatprep.subr.mxu0 0.0
    %348 = vmatpush1.msra.mxu0 0.0
    %349 = vmatprep.subr.mxu0 0.0
    %350 = vmatpush1.msra.mxu0 0.0
    %351 = vmatprep.subr.mxu0 0.0
    %352 = vmatpush1.msra.mxu0 0.0
    %353 = vmatprep.subr.mxu0 0.0
    %354 = vmatpush1.msra.mxu0 0.0
    %355 = vmatprep.subr.mxu0 0.0
    %356 = vmatpush1.msra.mxu0 0.0
    %357 = vmatprep.subr.mxu0 0.0
    %358 = vmatpush1.msra.mxu0 0.0
    %359 = vmatprep.subr.mxu0 0.0
    %360 = vmatpush1.msra.mxu0 0.0
    %361 = vmatprep.subr.mxu0 0.0
    %362 = vmatpush1.msra.mxu0 0.0
    %363 = vmatprep.subr.mxu0 0.0
    %364 = vmatpush1.msra.mxu0 0.0
    %365 = vmatprep.subr.mxu0 0.0
    %366 = vmatpush1.msra.mxu0 0.0
    %367 = vmatprep.subr.mxu0 0.0
    %368 = vmatpush1.msra.mxu0 0.0
    %369 = vmatprep.subr.mxu0 0.0
    %370 = vmatpush1.msra.mxu0 0.0
    %371 = vmatprep.subr.mxu0 0.0
    %372 = vmatpush1.msra.mxu0 0.0
    %373 = vmatprep.subr.mxu0 0.0
    %374 = vmatpush1.msra.mxu0 0.0
    %375 = vmatprep.subr.mxu0 0.0
    %376 = vmatpush1.msra.mxu0 0.0
    %377 = vmatprep.subr.mxu0 0.0
    %378 = vmatpush1.msra.mxu0 0.0
    %379 = vmatprep.subr.mxu0 0.0
    %380 = vmatpush1.msra.mxu0 0.0
    %381 = vmatprep.subr.mxu0 0.0
    %382 = vmatpush1.msra.mxu0 0.0
    %383 = vmatprep.subr.mxu0 0.0
    %384 = vmatpush1.msra.mxu0 0.0
    %385 = vmatprep.subr.mxu0 0.0
    %386 = vmatpush1.msra.mxu0 0.0
    %387 = vmatprep.mubr.f32.mxu0 0.0
    %388 = vmatmul.mubr.f32.gmra.mrb[0].mxu0 %v276
    %v389 = vpop.f32.mrb[0].mxu0
    %v390 = vadd.f32 0.0, %v389
    %v391 = vpop.f32.mrb[0].mxu0
    %392 = vmatprep.mubr.f32.mxu0 0.0
    %393 = vmatmul.mubr.f32.gmra.mrb[0].mxu0 %v279
    %v394 = vpop.f32.mrb[0].mxu0
    %v395 = vadd.f32 0.0, %v394
    %v396 = vpop.f32.mrb[0].mxu0
    %397 = vmatprep.mubr.f32.mxu0 0.0
    %398 = vmatmul.mubr.f32.gmra.mrb[0].mxu0 %v282
    %v399 = vpop.f32.mrb[0].mxu0
    %v400 = vadd.f32 0.0, %v399
    %v401 = vpop.f32.mrb[0].mxu0
    %402 = vmatprep.mubr.f32.mxu0 0.0
    %403 = vmatmul.mubr.f32.gmra.mrb[0].mxu0 %v285
    %v404 = vpop.f32.mrb[0].mxu0
    %v405 = vadd.f32 0.0, %v404
    %v406 = vpop.f32.mrb[0].mxu0
    %407 = vmatprep.mubr.f32.mxu0 0.0
    %408 = vmatmul.mubr.f32.gmra.mrb[0].mxu0 %v288
    %v409 = vpop.f32.mrb[0].mxu0
    %v410 = vadd.f32 0.0, %v409
    %v411 = vpop.f32.mrb[0].mxu0
    %412 = vmatprep.mubr.f32.mxu0 0.0
    %413 = vmatmul.mubr.f32.gmra.mrb[0].mxu0 %v291
    %v414 = vpop.f32.mrb[0].mxu0
    %v415 = vadd.f32 0.0, %v414
    %v416 = vpop.f32.mrb[0].mxu0
    %417 = vmatprep.mubr.f32.mxu0 0.0
    %418 = vmatmul.mubr.f32.gmra.mrb[0].mxu0 %v294
    %v419 = vpop.f32.mrb[0].mxu0
    %v420 = vadd.f32 0.0, %v419
    %v421 = vpop.f32.mrb[0].mxu0
    %422 = vmatprep.mubr.f32.mxu0 0.0
    %423 = vmatmul.mubr.f32.gmra.mrb[0].mxu0 %v297
    %v424 = vpop.f32.mrb[0].mxu0
    %v425 = vadd.f32 0.0, %v424
    %v426 = vpop.f32.mrb[0].mxu0
    %427 = vmatprep.mubr.f32.mxu0 0.0
    %428 = vmatmul.mubr.f32.gmra.mrb[0].mxu0 %v300
    %v429 = vpop.f32.mrb[0].mxu0
    %v430 = vadd.f32 0.0, %v429
    %v431 = vpop.f32.mrb[0].mxu0
    %432 = vmatprep.mubr.f32.mxu0 0.0
    %433 = vmatmul.mubr.f32.gmra.mrb[0].mxu0 %v303
    %v434 = vpop.f32.mrb[0].mxu0
    %v435 = vadd.f32 0.0, %v434
    %v436 = vpop.f32.mrb[0].mxu0
    %437 = vmatprep.mubr.f32.mxu0 0.0
    %438 = vmatmul.mubr.f32.gmra.mrb[0].mxu0 %v306
    %v439 = vpop.f32.mrb[0].mxu0
    %v440 = vadd.f32 0.0, %v439
    %v441 = vpop.f32.mrb[0].mxu0
    %442 = vmatprep.mubr.f32.mxu0 0.0
    %443 = vmatmul.mubr.f32.gmra.mrb[0].mxu0 %v309
    %v444 = vpop.f32.mrb[0].mxu0
    %v445 = vadd.f32 0.0, %v444
    %v446 = vpop.f32.mrb[0].mxu0
    %447 = vmatprep.mubr.f32.mxu0 0.0
    %448 = vmatmul.mubr.f32.gmra.mrb[0].mxu0 %v312
    %v449 = vpop.f32.mrb[0].mxu0
    %v450 = vadd.f32 0.0, %v449
    %v451 = vpop.f32.mrb[0].mxu0
    %452 = vmatprep.mubr.f32.mxu0 0.0
    %453 = vmatmul.mubr.f32.gmra.mrb[0].mxu0 %v315
    %v454 = vpop.f32.mrb[0].mxu0
    %v455 = vadd.f32 0.0, %v454
    %v456 = vpop.f32.mrb[0].mxu0
    %457 = vmatprep.mubr.f32.mxu0 0.0
    %458 = vmatmul.mubr.f32.gmra.mrb[0].mxu0 %v318
    %v459 = vpop.f32.mrb[0].mxu0
    %v460 = vadd.f32 0.0, %v459
    %v461 = vpop.f32.mrb[0].mxu0
    %462 = vmatprep.mubr.f32.mxu0 0.0
    %463 = vmatmul.mubr.f32.gmra.mrb[0].mxu0 %v321
    %v464 = vpop.f32.mrb[0].mxu0
    %v465 = vadd.f32 0.0, %v464
    %v466 = vpop.f32.mrb[0].mxu0
    %467 = vdwg.mxu0
    %468 = vxpose.xlu0.b32.start [1/16] %v142, 128
    %469 = vxpose.xlu0.b32.cont [2/16] 0.0, 128
    %470 = vxpose.xlu0.b32.cont [3/16] 0.0, 128
    %471 = vxpose.xlu0.b32.cont [4/16] 0.0, 128
    %472 = vxpose.xlu0.b32.cont [5/16] 0.0, 128
    %473 = vxpose.xlu0.b32.cont [6/16] 0.0, 128
    %474 = vxpose.xlu0.b32.cont [7/16] 0.0, 128
    %475 = vxpose.xlu0.b32.cont [8/16] 0.0, 128
    %476 = vxpose.xlu0.b32.cont [9/16] 0.0, 128
    %477 = vxpose.xlu0.b32.cont [10/16] 0.0, 128
    %478 = vxpose.xlu0.b32.cont [11/16] 0.0, 128
    %479 = vxpose.xlu0.b32.cont [12/16] 0.0, 128
    %480 = vxpose.xlu0.b32.cont [13/16] 0.0, 128
    %481 = vxpose.xlu0.b32.cont [14/16] 0.0, 128
    %482 = vxpose.xlu0.b32.cont [15/16] 0.0, 128
    %483 = vxpose.xlu0.b32.end [16/16] 0.0, 128
    %v484 = vpop.trf.xlu0
    %v485 = vpop.trf.xlu0
    %v486 = vpop.trf.xlu0
    %v487 = vpop.trf.xlu0
    %v488 = vpop.trf.xlu0
    %v489 = vpop.trf.xlu0
    %v490 = vpop.trf.xlu0
    %v491 = vpop.trf.xlu0
    %v492 = vpop.trf.xlu0
    %v493 = vpop.trf.xlu0
    %v494 = vpop.trf.xlu0
    %v495 = vpop.trf.xlu0
    %v496 = vpop.trf.xlu0
    %v497 = vpop.trf.xlu0
    %v498 = vpop.trf.xlu0
    %v499 = vpop.trf.xlu0
    %v501 = vsel %vm274, %v484, 0
    %v504 = vsel %vm274, %v485, 0
    %v507 = vsel %vm274, %v486, 0
    %v510 = vsel %vm274, %v487, 0
    %v513 = vsel %vm274, %v488, 0
    %v516 = vsel %vm274, %v489, 0
    %v519 = vsel %vm274, %v490, 0
    %v522 = vsel %vm274, %v491, 0
    %v525 = vsel %vm274, %v492, 0
    %v528 = vsel %vm274, %v493, 0
    %v531 = vsel %vm274, %v494, 0
    %v534 = vsel %vm274, %v495, 0
    %v537 = vsel %vm274, %v496, 0
    %v540 = vsel %vm274, %v497, 0
    %v543 = vsel %vm274, %v498, 0
    %v546 = vsel %vm274, %v499, 0
    %548 = vmatprep.subr.mxu0 0.0
    %549 = vmatpush1.msra.mxu0 %v239
    %550 = vmatprep.subr.mxu0 0.0
    %551 = vmatpush1.msra.mxu0 0.0
    %552 = vmatprep.subr.mxu0 0.0
    %553 = vmatpush1.msra.mxu0 0.0
    %554 = vmatprep.subr.mxu0 0.0
    %555 = vmatpush1.msra.mxu0 0.0
    %556 = vmatprep.subr.mxu0 0.0
    %557 = vmatpush1.msra.mxu0 0.0
    %558 = vmatprep.subr.mxu0 0.0
    %559 = vmatpush1.msra.mxu0 0.0
    %560 = vmatprep.subr.mxu0 0.0
    %561 = vmatpush1.msra.mxu0 0.0
    %562 = vmatprep.subr.mxu0 0.0
    %563 = vmatpush1.msra.mxu0 0.0
    %564 = vmatprep.subr.mxu0 0.0
    %565 = vmatpush1.msra.mxu0 0.0
    %566 = vmatprep.subr.mxu0 0.0
    %567 = vmatpush1.msra.mxu0 0.0
    %568 = vmatprep.subr.mxu0 0.0
    %569 = vmatpush1.msra.mxu0 0.0
    %570 = vmatprep.subr.mxu0 0.0
    %571 = vmatpush1.msra.mxu0 0.0
    %572 = vmatprep.subr.mxu0 0.0
    %573 = vmatpush1.msra.mxu0 0.0
    %574 = vmatprep.subr.mxu0 0.0
    %575 = vmatpush1.msra.mxu0 0.0
    %576 = vmatprep.subr.mxu0 0.0
    %577 = vmatpush1.msra.mxu0 0.0
    %578 = vmatprep.subr.mxu0 0.0
    %579 = vmatpush1.msra.mxu0 0.0
    %580 = vmatprep.subr.mxu0 0.0
    %581 = vmatpush1.msra.mxu0 0.0
    %582 = vmatprep.subr.mxu0 0.0
    %583 = vmatpush1.msra.mxu0 0.0
    %584 = vmatprep.subr.mxu0 0.0
    %585 = vmatpush1.msra.mxu0 0.0
    %586 = vmatprep.subr.mxu0 0.0
    %587 = vmatpush1.msra.mxu0 0.0
    %588 = vmatprep.subr.mxu0 0.0
    %589 = vmatpush1.msra.mxu0 0.0
    %590 = vmatprep.subr.mxu0 0.0
    %591 = vmatpush1.msra.mxu0 0.0
    %592 = vmatprep.subr.mxu0 0.0
    %593 = vmatpush1.msra.mxu0 0.0
    %594 = vmatprep.subr.mxu0 0.0
    %595 = vmatpush1.msra.mxu0 0.0
    %596 = vmatprep.subr.mxu0 0.0
    %597 = vmatpush1.msra.mxu0 0.0
    %598 = vmatprep.subr.mxu0 0.0
    %599 = vmatpush1.msra.mxu0 0.0
    %600 = vmatprep.subr.mxu0 0.0
    %601 = vmatpush1.msra.mxu0 0.0
    %602 = vmatprep.subr.mxu0 0.0
    %603 = vmatpush1.msra.mxu0 0.0
    %604 = vmatprep.subr.mxu0 0.0
    %605 = vmatpush1.msra.mxu0 0.0
    %606 = vmatprep.subr.mxu0 0.0
    %607 = vmatpush1.msra.mxu0 0.0
    %608 = vmatprep.subr.mxu0 0.0
    %609 = vmatpush1.msra.mxu0 0.0
    %610 = vmatprep.subr.mxu0 0.0
    %611 = vmatpush1.msra.mxu0 0.0
    %612 = vmatprep.mubr.f32.mxu0 0.0
    %613 = vmatmul.mubr.f32.gmra.mrb[0].mxu0 %v501
    %v614 = vpop.f32.mrb[0].mxu0
    %v615 = vadd.f32 0.0, %v614
    %v616 = vpop.f32.mrb[0].mxu0
    %617 = vmatprep.mubr.f32.mxu0 0.0
    %618 = vmatmul.mubr.f32.gmra.mrb[0].mxu0 %v504
    %v619 = vpop.f32.mrb[0].mxu0
    %v620 = vadd.f32 0.0, %v619
    %v621 = vpop.f32.mrb[0].mxu0
    %622 = vmatprep.mubr.f32.mxu0 0.0
    %623 = vmatmul.mubr.f32.gmra.mrb[0].mxu0 %v507
    %v624 = vpop.f32.mrb[0].mxu0
    %v625 = vadd.f32 0.0, %v624
    %v626 = vpop.f32.mrb[0].mxu0
    %627 = vmatprep.mubr.f32.mxu0 0.0
    %628 = vmatmul.mubr.f32.gmra.mrb[0].mxu0 %v510
    %v629 = vpop.f32.mrb[0].mxu0
    %v630 = vadd.f32 0.0, %v629
    %v631 = vpop.f32.mrb[0].mxu0
    %632 = vmatprep.mubr.f32.mxu0 0.0
    %633 = vmatmul.mubr.f32.gmra.mrb[0].mxu0 %v513
    %v634 = vpop.f32.mrb[0].mxu0
    %v635 = vadd.f32 0.0, %v634
    %v636 = vpop.f32.mrb[0].mxu0
    %637 = vmatprep.mubr.f32.mxu0 0.0
    %638 = vmatmul.mubr.f32.gmra.mrb[0].mxu0 %v516
    %v639 = vpop.f32.mrb[0].mxu0
    %v640 = vadd.f32 0.0, %v639
    %v641 = vpop.f32.mrb[0].mxu0
    %642 = vmatprep.mubr.f32.mxu0 0.0
    %643 = vmatmul.mubr.f32.gmra.mrb[0].mxu0 %v519
    %v644 = vpop.f32.mrb[0].mxu0
    %v645 = vadd.f32 0.0, %v644
    %v646 = vpop.f32.mrb[0].mxu0
    %647 = vmatprep.mubr.f32.mxu0 0.0
    %648 = vmatmul.mubr.f32.gmra.mrb[0].mxu0 %v522
    %v649 = vpop.f32.mrb[0].mxu0
    %v650 = vadd.f32 0.0, %v649
    %v651 = vpop.f32.mrb[0].mxu0
    %652 = vmatprep.mubr.f32.mxu0 0.0
    %653 = vmatmul.mubr.f32.gmra.mrb[0].mxu0 %v525
    %v654 = vpop.f32.mrb[0].mxu0
    %v655 = vadd.f32 0.0, %v654
    %v656 = vpop.f32.mrb[0].mxu0
    %657 = vmatprep.mubr.f32.mxu0 0.0
    %658 = vmatmul.mubr.f32.gmra.mrb[0].mxu0 %v528
    %v659 = vpop.f32.mrb[0].mxu0
    %v660 = vadd.f32 0.0, %v659
    %v661 = vpop.f32.mrb[0].mxu0
    %662 = vmatprep.mubr.f32.mxu0 0.0
    %663 = vmatmul.mubr.f32.gmra.mrb[0].mxu0 %v531
    %v664 = vpop.f32.mrb[0].mxu0
    %v665 = vadd.f32 0.0, %v664
    %v666 = vpop.f32.mrb[0].mxu0
    %667 = vmatprep.mubr.f32.mxu0 0.0
    %668 = vmatmul.mubr.f32.gmra.mrb[0].mxu0 %v534
    %v669 = vpop.f32.mrb[0].mxu0
    %v670 = vadd.f32 0.0, %v669
    %v671 = vpop.f32.mrb[0].mxu0
    %672 = vmatprep.mubr.f32.mxu0 0.0
    %673 = vmatmul.mubr.f32.gmra.mrb[0].mxu0 %v537
    %v674 = vpop.f32.mrb[0].mxu0
    %v675 = vadd.f32 0.0, %v674
    %v676 = vpop.f32.mrb[0].mxu0
    %677 = vmatprep.mubr.f32.mxu0 0.0
    %678 = vmatmul.mubr.f32.gmra.mrb[0].mxu0 %v540
    %v679 = vpop.f32.mrb[0].mxu0
    %v680 = vadd.f32 0.0, %v679
    %v681 = vpop.f32.mrb[0].mxu0
    %682 = vmatprep.mubr.f32.mxu0 0.0
    %683 = vmatmul.mubr.f32.gmra.mrb[0].mxu0 %v543
    %v684 = vpop.f32.mrb[0].mxu0
    %v685 = vadd.f32 0.0, %v684
    %v686 = vpop.f32.mrb[0].mxu0
    %687 = vmatprep.mubr.f32.mxu0 0.0
    %688 = vmatmul.mubr.f32.gmra.mrb[0].mxu0 %v546
    %v689 = vpop.f32.mrb[0].mxu0
    %v690 = vadd.f32 0.0, %v689
    %v691 = vpop.f32.mrb[0].mxu0
    %692 = vdwg.mxu0
    %693 = vmatprep.subr.mxu0 0.0
    %694 = vmatpush1.msra.mxu0 %v390
    %695 = vmatprep.subr.mxu0 0.0
    %696 = vmatpush1.msra.mxu0 %v395
    %697 = vmatprep.subr.mxu0 0.0
    %698 = vmatpush1.msra.mxu0 %v400
    %699 = vmatprep.subr.mxu0 0.0
    %700 = vmatpush1.msra.mxu0 %v405
    %701 = vmatprep.subr.mxu0 0.0
    %702 = vmatpush1.msra.mxu0 %v410
    %703 = vmatprep.subr.mxu0 0.0
    %704 = vmatpush1.msra.mxu0 %v415
    %705 = vmatprep.subr.mxu0 0.0
    %706 = vmatpush1.msra.mxu0 %v420
    %707 = vmatprep.subr.mxu0 0.0
    %708 = vmatpush1.msra.mxu0 %v425
    %709 = vmatprep.subr.mxu0 0.0
    %710 = vmatpush1.msra.mxu0 %v430
    %711 = vmatprep.subr.mxu0 0.0
    %712 = vmatpush1.msra.mxu0 %v435
    %713 = vmatprep.subr.mxu0 0.0
    %714 = vmatpush1.msra.mxu0 %v440
    %715 = vmatprep.subr.mxu0 0.0
    %716 = vmatpush1.msra.mxu0 %v445
    %717 = vmatprep.subr.mxu0 0.0
    %718 = vmatpush1.msra.mxu0 %v450
    %719 = vmatprep.subr.mxu0 0.0
    %720 = vmatpush1.msra.mxu0 %v455
    %721 = vmatprep.subr.mxu0 0.0
    %722 = vmatpush1.msra.mxu0 %v460
    %723 = vmatprep.subr.mxu0 0.0
    %724 = vmatpush1.msra.mxu0 %v465
    %725 = vmatprep.subr.mxu0 0.0
    %726 = vmatpush1.msra.mxu0 0.0
    %727 = vmatprep.subr.mxu0 0.0
    %728 = vmatpush1.msra.mxu0 0.0
    %729 = vmatprep.subr.mxu0 0.0
    %730 = vmatpush1.msra.mxu0 0.0
    %731 = vmatprep.subr.mxu0 0.0
    %732 = vmatpush1.msra.mxu0 0.0
    %733 = vmatprep.subr.mxu0 0.0
    %734 = vmatpush1.msra.mxu0 0.0
    %735 = vmatprep.subr.mxu0 0.0
    %736 = vmatpush1.msra.mxu0 0.0
    %737 = vmatprep.subr.mxu0 0.0
    %738 = vmatpush1.msra.mxu0 0.0
    %739 = vmatprep.subr.mxu0 0.0
    %740 = vmatpush1.msra.mxu0 0.0
    %741 = vmatprep.subr.mxu0 0.0
    %742 = vmatpush1.msra.mxu0 0.0
    %743 = vmatprep.subr.mxu0 0.0
    %744 = vmatpush1.msra.mxu0 0.0
    %745 = vmatprep.subr.mxu0 0.0
    %746 = vmatpush1.msra.mxu0 0.0
    %747 = vmatprep.subr.mxu0 0.0
    %748 = vmatpush1.msra.mxu0 0.0
    %749 = vmatprep.subr.mxu0 0.0
    %750 = vmatpush1.msra.mxu0 0.0
    %751 = vmatprep.subr.mxu0 0.0
    %752 = vmatpush1.msra.mxu0 0.0
    %753 = vmatprep.subr.mxu0 0.0
    %754 = vmatpush1.msra.mxu0 0.0
    %755 = vmatprep.subr.mxu0 0.0
    %756 = vmatpush1.msra.mxu0 0.0
    %757 = vmatprep.mubr.f32.mxu0 0.0
    %758 = vmatmul.mubr.f32.gmra.mrb[0].mxu0 %v134
    %v759 = vpop.f32.mrb[0].mxu0
    %v760 = vadd.f32 0.0, %v759
    %v761 = vpop.f32.mrb[0].mxu0
    %762 = vdwg.mxu0
    %763 = vmatprep.subr.mxu0 0.0
    %764 = vmatpush1.msra.mxu0 %v615
    %765 = vmatprep.subr.mxu0 0.0
    %766 = vmatpush1.msra.mxu0 %v620
    %767 = vmatprep.subr.mxu0 0.0
    %768 = vmatpush1.msra.mxu0 %v625
    %769 = vmatprep.subr.mxu0 0.0
    %770 = vmatpush1.msra.mxu0 %v630
    %771 = vmatprep.subr.mxu0 0.0
    %772 = vmatpush1.msra.mxu0 %v635
    %773 = vmatprep.subr.mxu0 0.0
    %774 = vmatpush1.msra.mxu0 %v640
    %775 = vmatprep.subr.mxu0 0.0
    %776 = vmatpush1.msra.mxu0 %v645
    %777 = vmatprep.subr.mxu0 0.0
    %778 = vmatpush1.msra.mxu0 %v650
    %779 = vmatprep.subr.mxu0 0.0
    %780 = vmatpush1.msra.mxu0 %v655
    %781 = vmatprep.subr.mxu0 0.0
    %782 = vmatpush1.msra.mxu0 %v660
    %783 = vmatprep.subr.mxu0 0.0
    %784 = vmatpush1.msra.mxu0 %v665
    %785 = vmatprep.subr.mxu0 0.0
    %786 = vmatpush1.msra.mxu0 %v670
    %787 = vmatprep.subr.mxu0 0.0
    %788 = vmatpush1.msra.mxu0 %v675
    %789 = vmatprep.subr.mxu0 0.0
    %790 = vmatpush1.msra.mxu0 %v680
    %791 = vmatprep.subr.mxu0 0.0
    %792 = vmatpush1.msra.mxu0 %v685
    %793 = vmatprep.subr.mxu0 0.0
    %794 = vmatpush1.msra.mxu0 %v690
    %795 = vmatprep.subr.mxu0 0.0
    %796 = vmatpush1.msra.mxu0 0.0
    %797 = vmatprep.subr.mxu0 0.0
    %798 = vmatpush1.msra.mxu0 0.0
    %799 = vmatprep.subr.mxu0 0.0
    %800 = vmatpush1.msra.mxu0 0.0
    %801 = vmatprep.subr.mxu0 0.0
    %802 = vmatpush1.msra.mxu0 0.0
    %803 = vmatprep.subr.mxu0 0.0
    %804 = vmatpush1.msra.mxu0 0.0
    %805 = vmatprep.subr.mxu0 0.0
    %806 = vmatpush1.msra.mxu0 0.0
    %807 = vmatprep.subr.mxu0 0.0
    %808 = vmatpush1.msra.mxu0 0.0
    %809 = vmatprep.subr.mxu0 0.0
    %810 = vmatpush1.msra.mxu0 0.0
    %811 = vmatprep.subr.mxu0 0.0
    %812 = vmatpush1.msra.mxu0 0.0
    %813 = vmatprep.subr.mxu0 0.0
    %814 = vmatpush1.msra.mxu0 0.0
    %815 = vmatprep.subr.mxu0 0.0
    %816 = vmatpush1.msra.mxu0 0.0
    %817 = vmatprep.subr.mxu0 0.0
    %818 = vmatpush1.msra.mxu0 0.0
    %819 = vmatprep.subr.mxu0 0.0
    %820 = vmatpush1.msra.mxu0 0.0
    %821 = vmatprep.subr.mxu0 0.0
    %822 = vmatpush1.msra.mxu0 0.0
    %823 = vmatprep.subr.mxu0 0.0
    %824 = vmatpush1.msra.mxu0 0.0
    %825 = vmatprep.subr.mxu0 0.0
    %826 = vmatpush1.msra.mxu0 0.0
    %827 = vmatprep.mubr.f32.mxu0 0.0
    %828 = vmatmul.mubr.f32.gmra.mrb[0].mxu0 %v140
    %v829 = vpop.f32.mrb[0].mxu0
    %v830 = vadd.f32 0.0, %v829
    %v831 = vpop.f32.mrb[0].mxu0
    %832 = vdwg.mxu0
    %833 = vst [vmem:[#allocation2] sm:$0xff] %v760
    %834 = vst [vmem:[#allocation2 + $0x8] sm:$0xff] %v830
    // Predicated region
    $region22: #{consciousness_attention.1} parent=1 // pred_check
      _
    $region23: #{consciousness_attention.1} parent=1 // pred_check_branch
      %836 = sbr.rel (0) target = $region25
    $region24: #{consciousness_attention.1} parent=1 // pred_region
      %s838 = ssub.s32 256, 256
      %839 = vsyncadd [#allocation3], %s838
      %s840 = sshll.u32 [#allocation2], 4
      %s841 = int_to_ptr.vmem [resolvable:$true] %s840
      %846 = dma.vmem_to_hbm [thread:$0]  %s841, 256, %s5, [#allocation3], 128, 128, 8
    $region25: #{consciousness_attention.1} parent=1 // pred_fallthru
      _
    // Predicated region
    $region26: #{consciousness_attention.1} parent=1 // pred_check
      _
    $region27: #{consciousness_attention.1} parent=1 // pred_check_branch
      %848 = sbr.rel (0) target = $region29
    $region28: #{consciousness_attention.1} parent=1 // pred_region
      %849 = dma.done [#allocation3], 256
    $region29: #{consciousness_attention.1} parent=1 // pred_fallthru
      _
    %850 = vsyncpa [#allocation3], 1

</llo_original>
